<compile_context>
chip_gen: v6e
topology: v6e:2x2x1
jax: 0.10.0
libtpu: 0.0.40
codegen_flags: <defaults>
</compile_context>

<pallas_src>
import functools

import jax
import jax.numpy as jnp
from jax.experimental import pallas as pl
from jax.experimental.pallas import tpu as pltpu
from jax.scipy.linalg import block_diag

LEAKY_SLOPE = 0.01                       # nn.LeakyReLU default
_BN_EPS = 1e-5
_INV_SQRT2 = 0.7071067811865476          # 1/sqrt(2)
_INV_SQRT_2PI = 0.3989422804014327       # 1/sqrt(2*pi)
_LOG_MIN_STD = -13.815510557964274       # log(1e-6)
# Abramowitz & Stegun 7.1.25 erf coefficients (|abs err| < 2.5e-5)
_A1, _A2, _A3 = 0.3480242, -0.0958798, 0.7478556
_P_ERF = 0.47047


def uniform_flow_kernel(zx_ref, w1_ref, w2_ref, b_ref, out_ref,
                        *, dz, hidden, n_components):
    """Everything transposed: batch lives on the lane axis.

    zx_ref : (dz+1, TB) f32, rows 0..dz-1 = z, last row = x
    w1_ref : (3H, dz+1) bf16 (last column zero)   b_ref : (3H + 6C, 1) f32
    w2_ref : (3C, 3H) bf16 (block-diagonal)       out_ref: (2, TB) f32
                                                   [row 0: e, row 1: log p_hat]
    """
    H3 = 3 * hidden
    C = n_components
    C3 = 3 * C

    zx = zx_ref[...]                              # (dz+1, TB) f32
    x = zx[dz:dz + 1, :]                          # (1, TB)  f32 (kept full precision)
    zb = zx.astype(jnp.bfloat16)                  # bf16 MXU operand (x row * 0 column)

    b1 = b_ref[0:H3, :]                           # (3H, 1) first-layer bias (BN1 folded)
    b2 = b_ref[H3:H3 + C3, :]                     # (3C, 1) second-layer bias (t1, BN2 folded)
    t2 = b_ref[H3 + C3:H3 + 2 * C3, :]            # (3C, 1) post-activation BN2 shift

    # Fused first layer for all three heads: Linear + LeakyReLU (BN scale folded).
    h = jnp.dot(w1_ref[...], zb, preferred_element_type=jnp.float32) + b1
    h = jnp.maximum(h, LEAKY_SLOPE * h)                               # (3H, TB)

    # Fused block-diagonal second layer + LeakyReLU + post-shift.
    o = jnp.dot(w2_ref[...], h.astype(jnp.bfloat16),
                preferred_element_type=jnp.float32) + b2
    o = jnp.maximum(o, LEAKY_SLOPE * o) + t2                          # (3C, TB)

    mu = o[0:C, :]
    logstd = o[C:2 * C, :]
    w_logits = o[2 * C:3 * C, :]

    # inv_std = 1 / clip(exp(logstd), min=1e-6) -- no divide, no log(std).
    inv_std = jnp.exp(-jnp.maximum(logstd, _LOG_MIN_STD))             # (C, TB)

    zs = (x - mu) * inv_std                                           # (C, TB)
    g = jnp.exp(-0.5 * zs * zs)        # shared Gaussian exponential (PDF and erf)

    # erf(|zs|/sqrt(2)) via A&S 7.1.25; exp(-y^2) term equals g, so no extra
    # transcendental. cdf assembled from q = 0.5*poly*g with one where.
    y = jnp.abs(zs) * _INV_SQRT2
    t = pl.reciprocal(1.0 + _P_ERF * y, approx=True)                  # EUP slot
    poly = ((_A3 * t + _A2) * t + _A1) * t
    q = 0.5 * poly * g
    cdf = jnp.where(zs >= 0, 1.0 - q, q)                              # Normal CDF

    pdf = g * inv_std * _INV_SQRT_2PI                                 # exp(Normal.log_prob)

    # softmax over components (sublane axis); approx reciprocal runs on the EUP slot.
    m = jnp.max(w_logits, axis=0, keepdims=True)
    ew = jnp.exp(w_logits - m)
    w = ew * pl.reciprocal(jnp.sum(ew, axis=0, keepdims=True), approx=True)

    e = jnp.sum(cdf * w, axis=0, keepdims=True)                       # (1, TB)
    p_hat = jnp.maximum(jnp.sum(pdf * w, axis=0, keepdims=True), 1e-24)

    out_ref[0:1, :] = e
    out_ref[1:2, :] = jnp.log(p_hat)


# ----------------------------------------------------------------------------- host side

def make_raw_params(key, dz, hidden, n_components):
    """Torch-style init for the three MLP heads + fresh eval-mode BatchNorm stats."""
    def linear(k, fan_in, fan_out):
        kw, kb = jax.random.split(k)
        bound = float(fan_in) ** -0.5
        w = jax.random.uniform(kw, (fan_in, fan_out), jnp.float32, -bound, bound)
        b = jax.random.uniform(kb, (fan_out,), jnp.float32, -bound, bound)
        return w, b

    def bn_identity(n):   # (gamma, beta, running_mean, running_var)
        return (jnp.ones((n,), jnp.float32), jnp.zeros((n,), jnp.float32),
                jnp.zeros((n,), jnp.float32), jnp.ones((n,), jnp.float32))

    keys = jax.random.split(key, 6)
    heads = []
    for h in range(3):                     # 0: mu, 1: logstd, 2: w
        w1, b1 = linear(keys[2 * h], dz, hidden)
        w2, b2 = linear(keys[2 * h + 1], hidden, n_components)
        heads.append((w1, b1, bn_identity(hidden), w2, b2, bn_identity(n_components)))
    return heads


def fold_and_pack(heads, eps=_BN_EPS):
    """Fold eval-mode BN affines into the Linear layers and pack the 3 heads.

    BN(LReLU(x@W+b)) = s*LReLU(x@W+b) + t = LReLU(x@(W*s) + b*s) + t   (s > 0),
    and the additive t of layer 1 is folded into the layer-2 bias (t @ W2).
    Returns:
      w1a  : (3H, dz+1) bf16  (first-layer weights, zero column for the fused x row)
      w2bd : (3C, 3H)   bf16  block-diagonal second layer
      bias : (3H + 6C, 1) f32 packed biases / post-shifts
    """
    w1t_blocks, w2_blocks, b1_list, b2_list, t2_list = [], [], [], [], []
    for (w1, b1, bn1, w2, b2, bn2) in heads:
        g1, be1, m1, v1 = bn1
        g2, be2, m2, v2 = bn2
        s1 = g1 / jnp.sqrt(v1 + eps); t1 = be1 - m1 * s1
        s2 = g2 / jnp.sqrt(v2 + eps); t2 = be2 - m2 * s2
        assert bool(jnp.all(s1 > 0)) and bool(jnp.all(s2 > 0)), \
            "BN fold through LeakyReLU requires positive scale"
        w1f = w1 * s1[None, :]
        b1f = b1 * s1
        b2e = b2 + t1 @ w2                 # layer-1 additive shift folded into layer-2 bias
        w2f = w2 * s2[None, :]
        b2f = b2e * s2
        w1t_blocks.append(w1f.T)           # (H, dz)
        w2_blocks.append(w2f.T)            # (C, H)
        b1_list.append(b1f)
        b2_list.append(b2f)
        t2_list.append(t2)                 # stays post-activation (zero for fresh BN)

    w1t = jnp.concatenate(w1t_blocks, axis=0)                            # (3H, dz) f32
    w1a = jnp.concatenate([w1t, jnp.zeros((w1t.shape[0], 1), w1t.dtype)],
                          axis=1).astype(jnp.bfloat16)                   # (3H, dz+1) bf16
    w2bd = block_diag(*w2_blocks).astype(jnp.bfloat16)                   # (3C, 3H) bf16
    bias = jnp.concatenate(b1_list + b2_list + t2_list)[:, None].astype(jnp.float32)
    return w1a, w2bd, bias


def uniform_flow_forward(X, Z, packed, *, block_batch=None):
    w1a, w2bd, bias = packed
    B = X.shape[0]
    x2 = X.reshape(B, -1).astype(jnp.float32)
    assert x2.shape[1] == 1, "X.view(B,-1) must be (B,1) to broadcast against (B, n_components)"
    z = Z.astype(jnp.float32)
    dz = z.shape[1]
    hidden = w1a.shape[0] // 3
    n_components = w2bd.shape[0] // 3
    assert w1a.shape[1] == dz + 1

    if block_batch is None:
        # Big tiles amortize the ~600-cycle per-grid-step overhead; keep >= 2 grid
        # steps when B allows so ("parallel",) can shard across both v7x TCs.
        # At tb <= 2048 the f32 intermediates are only a few MB -- well inside every
        # generation's scoped-VMEM default (incl. v5e's ~16 MiB).
        tb = min(2048, max(128, 128 * pl.cdiv(pl.cdiv(B, 2), 128)))
    else:
        tb = int(block_batch)
    assert tb % 128 == 0, "batch tile must be a multiple of the 128-lane width"

    n_blocks = pl.cdiv(B, tb)
    Bp = n_blocks * tb
    pad = Bp - B
    # Fuse x into the z slab as its last row: one lane-major (dz+1, Bp) input.
    zx_t = jnp.concatenate([z.T, x2.T], axis=0)            # (dz+1, B)
    zx_t = jnp.pad(zx_t, ((0, 0), (0, pad)))                # (dz+1, Bp)

    kernel = functools.partial(uniform_flow_kernel,
                               dz=dz, hidden=hidden, n_components=n_components)

    out = pl.pallas_call(
        kernel,
        grid=(n_blocks,),
        in_specs=[
            pl.BlockSpec((dz + 1, tb), lambda i: (0, i)),   # fused z|x tile
            pl.BlockSpec(w1a.shape, lambda i: (0, 0)),      # weights: VMEM-resident
            pl.BlockSpec(w2bd.shape, lambda i: (0, 0)),
            pl.BlockSpec(bias.shape, lambda i: (0, 0)),
        ],
        out_specs=pl.BlockSpec((2, tb), lambda i: (0, i)),  # lane-dense (2, TB) slab
        out_shape=jax.ShapeDtypeStruct((2, Bp), jnp.float32),
        compiler_params=pltpu.CompilerParams(
            dimension_semantics=("parallel",)),             # shards batch across TCs (v7x)
    )(zx_t, w1a, w2bd, bias)

    e = out[0, :B][:, None]
    log_de_dx = out[1, :B][:, None]
    return e, log_de_dx


def reference_forward(X, Z, heads, eps=_BN_EPS):
    """Pure-JAX f32 reference of the original (unfolded) PyTorch module."""
    X2 = X.reshape(X.shape[0], -1).astype(jnp.float32)
    Z = Z.astype(jnp.float32)

    def run_head(p):
        w1, b1, (g1, be1, m1, v1), w2, b2, (g2, be2, m2, v2) = p
        h = Z @ w1 + b1
        h = jnp.where(h > 0, h, LEAKY_SLOPE * h)
        h = (h - m1) / jnp.sqrt(v1 + eps) * g1 + be1
        o = h @ w2 + b2
        o = jnp.where(o > 0, o, LEAKY_SLOPE * o)
        o = (o - m2) / jnp.sqrt(v2 + eps) * g2 + be2
        return o

    mu, logstd, wl = run_head(heads[0]), run_head(heads[1]), run_head(heads[2])
    std = jnp.clip(jnp.exp(logstd), 1e-6, None)
    w = jax.nn.softmax(wl, axis=1)
    zs = (X2 - mu) / std
    cdf = 0.5 * (1.0 + jax.scipy.special.erf(zs * _INV_SQRT2))
    pdf = jnp.exp(-0.5 * zs * zs) / std * _INV_SQRT_2PI
    e = jnp.sum(cdf * w, axis=1, keepdims=True)
    p_hat = jnp.clip(jnp.sum(pdf * w, axis=1, keepdims=True), 1e-24, None)
    return e, jnp.log(p_hat)


if __name__ == "__main__":
    B, dz, hidden, n_components = 512, 8, 32, 16   # auto tile -> TB=256, 2 parallel grid steps

    key = jax.random.PRNGKey(0)
    kx, kz, kp = jax.random.split(key, 3)
    X = jax.random.normal(kx, (B, 1), jnp.float32)       # univariate target variable
    Z = jax.random.normal(kz, (B, dz), jnp.float32)      # conditioning variable

    heads = make_raw_params(kp, dz, hidden, n_components)
    packed = fold_and_pack(heads)

    e, log_de_dx = uniform_flow_forward(X, Z, packed)
    jax.block_until_ready(e)
    jax.block_until_ready(log_de_dx)

    assert e.shape == (B, 1) and log_de_dx.shape == (B, 1)
    assert bool(jnp.all(jnp.isfinite(e))) and bool(jnp.all(jnp.isfinite(log_de_dx)))

    # Correctness vs. the unfolded f32 reference. Tolerances cover the bf16 MXU
    # operands, the A&S 7.1.25 erf approximation (~2.5e-5) and the EUP approximate
    # reciprocals (softmax / erf). e lives in [0,1] and is very insensitive;
    # log p_hat amplifies mu/logstd error by ~|zs|/std, hence the looser bound.
    e_ref, ld_ref = reference_forward(X, Z, heads)
    assert float(jnp.max(jnp.abs(e - e_ref))) < 5e-2
    assert float(jnp.max(jnp.abs(log_de_dx - ld_ref))) < 1e-1

    print("KERNEL_OK")
</pallas_src>

<mosaic_0001>
module attributes {stable_mosaic.version = 11 : i64} {
  func.func @uniform_flow_kernel(%arg0: i32, %arg1: memref<9x256xf32, #tpu.memory_space<vmem>>, %arg2: memref<96x9xbf16, #tpu.memory_space<vmem>>, %arg3: memref<48x96xbf16, #tpu.memory_space<vmem>>, %arg4: memref<192x1xf32, #tpu.memory_space<vmem>>, %arg5: memref<2x256xf32, #tpu.memory_space<vmem>>) attributes {dimension_semantics = [#tpu.dimension_semantics<parallel>], iteration_bounds = array<i64: 2>, scalar_prefetch = 0 : i64, scratch_operands = 0 : i64, tpu.core_type = #tpu.core_type<tc>, window_params = [{transform_indices = @transform_0, window_bounds = array<i64: 9, 256>}, {pipeline_mode = #tpu.pipeline_mode<synchronous>, transform_indices = @transform_1, window_bounds = array<i64: 96, 9>}, {pipeline_mode = #tpu.pipeline_mode<synchronous>, transform_indices = @transform_2, window_bounds = array<i64: 48, 96>}, {pipeline_mode = #tpu.pipeline_mode<synchronous>, transform_indices = @transform_3, window_bounds = array<i64: 192, 1>}, {transform_indices = @transform_4, window_bounds = array<i64: 2, 256>}]} {
    %c0 = arith.constant 0 : index
    %c0_0 = arith.constant 0 : index
    %0 = vector.load %arg1[%c0, %c0_0] : memref<9x256xf32, #tpu.memory_space<vmem>>, vector<9x256xf32>
    %1 = vector.extract_strided_slice %0 {offsets = [8, 0], sizes = [1, 256], strides = [1, 1]} : vector<9x256xf32> to vector<1x256xf32>
    %2 = arith.truncf %0 : vector<9x256xf32> to vector<9x256xbf16>
    %c0_1 = arith.constant 0 : index
    %c0_2 = arith.constant 0 : index
    %3 = vector.load %arg4[%c0_1, %c0_2] : memref<192x1xf32, #tpu.memory_space<vmem>>, vector<96x1xf32>
    %c96 = arith.constant 96 : index
    %c0_3 = arith.constant 0 : index
    %4 = vector.load %arg4[%c96, %c0_3] : memref<192x1xf32, #tpu.memory_space<vmem>>, vector<48x1xf32>
    %c144 = arith.constant 144 : index
    %c0_4 = arith.constant 0 : index
    %5 = vector.load %arg4[%c144, %c0_4] : memref<192x1xf32, #tpu.memory_space<vmem>>, vector<48x1xf32>
    %c0_5 = arith.constant 0 : index
    %c0_6 = arith.constant 0 : index
    %6 = vector.load %arg2[%c0_5, %c0_6] : memref<96x9xbf16, #tpu.memory_space<vmem>>, vector<96x9xbf16>
    %cst = arith.constant dense<0.000000e+00> : vector<96x256xf32>
    %7 = tpu.matmul %6, %2, %cst {dimension_numbers = #tpu.dot_dimension_numbers<[1], [0], [0], [1], [0, 0, 1, 1], [], []>} : vector<96x9xbf16>, vector<9x256xbf16>, vector<96x256xf32> -> vector<96x256xf32>
    %8 = vector.broadcast %3 : vector<96x1xf32> to vector<96x256xf32>
    %9 = arith.addf %7, %8 : vector<96x256xf32>
    %cst_7 = arith.constant 0.00999999977 : f32
    %10 = vector.broadcast %cst_7 : f32 to vector<96x256xf32>
    %11 = arith.mulf %10, %9 : vector<96x256xf32>
    %12 = arith.maximumf %9, %11 : vector<96x256xf32>
    %c0_8 = arith.constant 0 : index
    %c0_9 = arith.constant 0 : index
    %13 = vector.load %arg3[%c0_8, %c0_9] : memref<48x96xbf16, #tpu.memory_space<vmem>>, vector<48x96xbf16>
    %14 = arith.truncf %12 : vector<96x256xf32> to vector<96x256xbf16>
    %cst_10 = arith.constant dense<0.000000e+00> : vector<48x256xf32>
    %15 = tpu.matmul %13, %14, %cst_10 {dimension_numbers = #tpu.dot_dimension_numbers<[1], [0], [0], [1], [0, 0, 1, 1], [], []>} : vector<48x96xbf16>, vector<96x256xbf16>, vector<48x256xf32> -> vector<48x256xf32>
    %16 = vector.broadcast %4 : vector<48x1xf32> to vector<48x256xf32>
    %17 = arith.addf %15, %16 : vector<48x256xf32>
    %cst_11 = arith.constant 0.00999999977 : f32
    %18 = vector.broadcast %cst_11 : f32 to vector<48x256xf32>
    %19 = arith.mulf %18, %17 : vector<48x256xf32>
    %20 = arith.maximumf %17, %19 : vector<48x256xf32>
    %21 = vector.broadcast %5 : vector<48x1xf32> to vector<48x256xf32>
    %22 = arith.addf %20, %21 : vector<48x256xf32>
    %23 = vector.extract_strided_slice %22 {offsets = [0, 0], sizes = [16, 256], strides = [1, 1]} : vector<48x256xf32> to vector<16x256xf32>
    %24 = vector.extract_strided_slice %22 {offsets = [16, 0], sizes = [16, 256], strides = [1, 1]} : vector<48x256xf32> to vector<16x256xf32>
    %25 = vector.extract_strided_slice %22 {offsets = [32, 0], sizes = [16, 256], strides = [1, 1]} : vector<48x256xf32> to vector<16x256xf32>
    %cst_12 = arith.constant -13.8155107 : f32
    %26 = vector.broadcast %cst_12 : f32 to vector<16x256xf32>
    %27 = arith.maximumf %24, %26 : vector<16x256xf32>
    %cst_13 = arith.constant 0.000000e+00 : f32
    %28 = vector.broadcast %cst_13 : f32 to vector<16x256xf32>
    %29 = arith.subf %28, %27 : vector<16x256xf32>
    %30 = math.exp %29 : vector<16x256xf32>
    %31 = vector.broadcast %1 : vector<1x256xf32> to vector<16x256xf32>
    %32 = arith.subf %31, %23 : vector<16x256xf32>
    %33 = arith.mulf %32, %30 : vector<16x256xf32>
    %cst_14 = arith.constant -5.000000e-01 : f32
    %34 = vector.broadcast %cst_14 : f32 to vector<16x256xf32>
    %35 = arith.mulf %34, %33 : vector<16x256xf32>
    %36 = arith.mulf %35, %33 : vector<16x256xf32>
    %37 = math.exp %36 : vector<16x256xf32>
    %38 = math.absf %33 : vector<16x256xf32>
    %cst_15 = arith.constant 0.707106769 : f32
    %39 = vector.broadcast %cst_15 : f32 to vector<16x256xf32>
    %40 = arith.mulf %38, %39 : vector<16x256xf32>
    %cst_16 = arith.constant 4.704700e-01 : f32
    %41 = vector.broadcast %cst_16 : f32 to vector<16x256xf32>
    %42 = arith.mulf %41, %40 : vector<16x256xf32>
    %cst_17 = arith.constant 1.000000e+00 : f32
    %43 = vector.broadcast %cst_17 : f32 to vector<16x256xf32>
    %44 = arith.addf %43, %42 : vector<16x256xf32>
    %45 = tpu.reciprocal %44 {approx = true} : vector<16x256xf32> -> vector<16x256xf32>
    %cst_18 = arith.constant 0.747855603 : f32
    %46 = vector.broadcast %cst_18 : f32 to vector<16x256xf32>
    %47 = arith.mulf %46, %45 : vector<16x256xf32>
    %cst_19 = arith.constant -9.587980e-02 : f32
    %48 = vector.broadcast %cst_19 : f32 to vector<16x256xf32>
    %49 = arith.addf %47, %48 : vector<16x256xf32>
    %50 = arith.mulf %49, %45 : vector<16x256xf32>
    %cst_20 = arith.constant 0.348024189 : f32
    %51 = vector.broadcast %cst_20 : f32 to vector<16x256xf32>
    %52 = arith.addf %50, %51 : vector<16x256xf32>
    %53 = arith.mulf %52, %45 : vector<16x256xf32>
    %cst_21 = arith.constant 5.000000e-01 : f32
    %54 = vector.broadcast %cst_21 : f32 to vector<16x256xf32>
    %55 = arith.mulf %54, %53 : vector<16x256xf32>
    %56 = arith.mulf %55, %37 : vector<16x256xf32>
    %cst_22 = arith.constant 0.000000e+00 : f32
    %57 = vector.broadcast %cst_22 : f32 to vector<16x256xf32>
    %58 = arith.cmpf oge, %33, %57 : vector<16x256xf32>
    %cst_23 = arith.constant 1.000000e+00 : f32
    %59 = vector.broadcast %cst_23 : f32 to vector<16x256xf32>
    %60 = arith.subf %59, %56 : vector<16x256xf32>
    %61 = arith.select %58, %60, %56 : vector<16x256xi1>, vector<16x256xf32>
    %62 = arith.mulf %37, %30 : vector<16x256xf32>
    %cst_24 = arith.constant 0.398942292 : f32
    %63 = vector.broadcast %cst_24 : f32 to vector<16x256xf32>
    %64 = arith.mulf %62, %63 : vector<16x256xf32>
    %cst_25 = arith.constant dense<0xFF800000> : vector<256xf32>
    %65 = vector.multi_reduction <maximumf>, %25, %cst_25 [0] : vector<16x256xf32> to vector<256xf32>
    %66 = vector.shape_cast %65 : vector<256xf32> to vector<1x256xf32>
    %67 = vector.broadcast %66 : vector<1x256xf32> to vector<16x256xf32>
    %68 = arith.subf %25, %67 : vector<16x256xf32>
    %69 = math.exp %68 : vector<16x256xf32>
    %cst_26 = arith.constant dense<0.000000e+00> : vector<256xf32>
    %70 = vector.multi_reduction <add>, %69, %cst_26 [0] : vector<16x256xf32> to vector<256xf32>
    %71 = vector.shape_cast %70 : vector<256xf32> to vector<1x256xf32>
    %72 = tpu.reciprocal %71 {approx = true} : vector<1x256xf32> -> vector<1x256xf32>
    %73 = vector.broadcast %72 : vector<1x256xf32> to vector<16x256xf32>
    %74 = arith.mulf %69, %73 : vector<16x256xf32>
    %75 = arith.mulf %61, %74 : vector<16x256xf32>
    %cst_27 = arith.constant dense<0.000000e+00> : vector<256xf32>
    %76 = vector.multi_reduction <add>, %75, %cst_27 [0] : vector<16x256xf32> to vector<256xf32>
    %77 = vector.shape_cast %76 : vector<256xf32> to vector<1x256xf32>
    %78 = arith.mulf %64, %74 : vector<16x256xf32>
    %cst_28 = arith.constant dense<0.000000e+00> : vector<256xf32>
    %79 = vector.multi_reduction <add>, %78, %cst_28 [0] : vector<16x256xf32> to vector<256xf32>
    %80 = vector.shape_cast %79 : vector<256xf32> to vector<1x256xf32>
    %cst_29 = arith.constant 1.000000e-24 : f32
    %81 = vector.broadcast %cst_29 : f32 to vector<1x256xf32>
    %82 = arith.maximumf %80, %81 : vector<1x256xf32>
    %c0_30 = arith.constant 0 : index
    %c0_31 = arith.constant 0 : index
    %83 = vector.load %arg5[%c0_30, %c0_31] : memref<2x256xf32, #tpu.memory_space<vmem>>, vector<1x256xf32>
    tpu.vector_store %arg5[%c0_30, %c0_31], %77 {strides = array<i32>} : memref<2x256xf32, #tpu.memory_space<vmem>>, vector<1x256xf32>,
    %84 = math.log %82 : vector<1x256xf32>
    %c1 = arith.constant 1 : index
    %c0_32 = arith.constant 0 : index
    %85 = vector.load %arg5[%c1, %c0_32] : memref<2x256xf32, #tpu.memory_space<vmem>>, vector<1x256xf32>
    tpu.vector_store %arg5[%c1, %c0_32], %84 {strides = array<i32>} : memref<2x256xf32, #tpu.memory_space<vmem>>, vector<1x256xf32>,
    return
  }
  func.func @transform_0(%arg0: i32) -> (i32, i32) {
    %c0_i32 = arith.constant 0 : i32
    %c0_i32_0 = arith.constant 0 : i32
    return %c0_i32, %arg0 : i32, i32
  }
  func.func @transform_1(%arg0: i32) -> (i32, i32) {
    %c0_i32 = arith.constant 0 : i32
    %c0_i32_0 = arith.constant 0 : i32
    %c0_i32_1 = arith.constant 0 : i32
    return %c0_i32, %c0_i32_0 : i32, i32
  }
  func.func @transform_2(%arg0: i32) -> (i32, i32) {
    %c0_i32 = arith.constant 0 : i32
    %c0_i32_0 = arith.constant 0 : i32
    %c0_i32_1 = arith.constant 0 : i32
    return %c0_i32, %c0_i32_0 : i32, i32
  }
  func.func @transform_3(%arg0: i32) -> (i32, i32) {
    %c0_i32 = arith.constant 0 : i32
    %c0_i32_0 = arith.constant 0 : i32
    %c0_i32_1 = arith.constant 0 : i32
    return %c0_i32, %c0_i32_0 : i32, i32
  }
  func.func @transform_4(%arg0: i32) -> (i32, i32) {
    %c0_i32 = arith.constant 0 : i32
    %c0_i32_0 = arith.constant 0 : i32
    return %c0_i32, %arg0 : i32, i32
  }
}

</mosaic_0001>

<llo_original>
// kernel: tpu_custom_call.1
$region0: #{tpu_custom_call.1}
  #allocation0 [shape = 'u32[]', space=smem, size = 0x4, offset = 0x4, fixed_abs, tag = 'smem constant byte address 0x4 - core index']
  #allocation1 [shape = 'u32[144,128]{1,0:T(1,128)}', space=vmem, size = 0x12000, scoped, tag = 'internal scratch']
  %s0 = inlined_call_operand.vmem [shape: f32[9,512], index: 0, kind: input, shape index: {}]
  %s1 = inlined_call_operand.vmem [shape: bf16[96,9], index: 1, kind: input, shape index: {}]
  %s2 = inlined_call_operand.vmem [shape: bf16[48,96], index: 2, kind: input, shape index: {}]
  %s3 = inlined_call_operand.vmem [shape: f32[192,1], index: 3, kind: input, shape index: {}]
  %s4 = inlined_call_operand.hbm [shape: f32[2,512], index: 4, kind: output, shape index: {}]
  %s5 = sld [smem:[#allocation0]]
  $region72: #{tpu_custom_call.1} parent=0
    _
  %s7 = ssub.s32 1, %s5
  %s8 = scalar_select 0, %s7, %s5
  $region1: #{tpu_custom_call.1} parent=0
    #allocation2 [shape = 'u8[32768]{0}', space=vmem, size = 0x8000, scoped, tag = 'input window, operand 0']
    #allocation3 [shape = 'u8[4096]{0}', space=vmem, size = 0x1000, scoped, tag = 'output window, operand 0']
    #allocation4 [shape = 's32[2]{0}', space=sflag, size = 0x8, scoped, tag = 'scoped memory for tpu_custom_call.1']
    %9 = vsyncpa [#allocation4], 0
    %s10 = scalar_lea.sflag [#allocation4], 1
    %11 = vsyncpa %s10, 0
    loop: start=0, step=1, limit=4
    $region2: #{tpu_custom_call.1} parent=1 // loop_pre_header
      _
    $region3: #{tpu_custom_call.1} parent=1 // loop_header
      %s13 = sphi 0, %s17
      %p14 = scmp.ge.s32.totalorder %s13, 4
      %s23 = sphi 0, %s25
      %s26 = sphi 0, %s23
      %s27 = sphi 0, %s26
      %s43 = sphi 0, %s27
      %s47 = sphi 0, %s47
      %s49 = sphi 0, %s47
      %s50 = sphi 0, %s49
      %s64 = sphi 0, %s50
      %s68 = sphi 0, %s68
      %s70 = sphi 0, %s68
      %s71 = sphi 0, %s70
      %s85 = sphi 0, %s71
      %s89 = sphi 0, %s89
      %s91 = sphi 0, %s89
      %s92 = sphi 0, %s91
      %s106 = sphi 0, %s92
      %s112 = sphi 0, %s114
      %s115 = sphi 0, %s112
      %s116 = sphi 0, %s115
      %s132 = sphi 0, %s116
    $region4: #{tpu_custom_call.1} parent=1 // loop_header_branch
      %16 = sbr.rel (%p14) target = $region8
    $region5: #{tpu_custom_call.1} parent=1 // loop_body
      %s18 = ssub.s32 %s13, 1
      %s19 = ssub.s32 %s13, 2
      %s20 = sadd.s32 %s13, 1
      %s21 = ssub.s32 %s13, %s20
      %p22 = scmp.eq.s32.totalorder %s21, 0
      %s24 = sadd.s32 %s23, 1
      %s25 = scalar_select %p22, %s23, %s24
      %p28 = pneg %p22
      %p29 = scmp.eq.s32.totalorder %s13, 1
      %p30 = por %p28, %p29
      %p31 = scmp.ne.s32.totalorder %s23, %s26
      %p32 = scmp.eq.s32.totalorder %s13, 0
      %p33 = por %p31, %p32
      %p34 = scmp.ne.s32.totalorder %s23, %s26
      %p35 = scmp.eq.s32.totalorder %s18, 1
      %p36 = por %p34, %p35
      %p37 = scmp.ne.s32.totalorder %s26, %s27
      %p38 = scmp.eq.s32.totalorder %s18, 0
      %p39 = por %p37, %p38
      %p40 = scmp.ne.s32.totalorder %s26, %s27
      %p41 = scmp.eq.s32.totalorder %s19, 1
      %p42 = por %p40, %p41
      %p44 = scmp.ne.s32.totalorder %s27, %s43
      %p45 = scmp.eq.s32.totalorder %s19, 0
      %p46 = por %p44, %p45
      %s48 = sadd.s32 %s47, 1
      %p51 = scmp.eq.s32.totalorder %s13, 1
      %p52 = scmp.ne.s32.totalorder %s47, %s49
      %p53 = scmp.eq.s32.totalorder %s13, 0
      %p54 = por %p52, %p53
      %p55 = scmp.ne.s32.totalorder %s47, %s49
      %p56 = scmp.eq.s32.totalorder %s18, 1
      %p57 = por %p55, %p56
      %p58 = scmp.ne.s32.totalorder %s49, %s50
      %p59 = scmp.eq.s32.totalorder %s18, 0
      %p60 = por %p58, %p59
      %p61 = scmp.ne.s32.totalorder %s49, %s50
      %p62 = scmp.eq.s32.totalorder %s19, 1
      %p63 = por %p61, %p62
      %p65 = scmp.ne.s32.totalorder %s50, %s64
      %p66 = scmp.eq.s32.totalorder %s19, 0
      %p67 = por %p65, %p66
      %s69 = sadd.s32 %s68, 1
      %p72 = scmp.eq.s32.totalorder %s13, 1
      %p73 = scmp.ne.s32.totalorder %s68, %s70
      %p74 = scmp.eq.s32.totalorder %s13, 0
      %p75 = por %p73, %p74
      %p76 = scmp.ne.s32.totalorder %s68, %s70
      %p77 = scmp.eq.s32.totalorder %s18, 1
      %p78 = por %p76, %p77
      %p79 = scmp.ne.s32.totalorder %s70, %s71
      %p80 = scmp.eq.s32.totalorder %s18, 0
      %p81 = por %p79, %p80
      %p82 = scmp.ne.s32.totalorder %s70, %s71
      %p83 = scmp.eq.s32.totalorder %s19, 1
      %p84 = por %p82, %p83
      %p86 = scmp.ne.s32.totalorder %s71, %s85
      %p87 = scmp.eq.s32.totalorder %s19, 0
      %p88 = por %p86, %p87
      %s90 = sadd.s32 %s89, 1
      %p93 = scmp.eq.s32.totalorder %s13, 1
      %p94 = scmp.ne.s32.totalorder %s89, %s91
      %p95 = scmp.eq.s32.totalorder %s13, 0
      %p96 = por %p94, %p95
      %p97 = scmp.ne.s32.totalorder %s89, %s91
      %p98 = scmp.eq.s32.totalorder %s18, 1
      %p99 = por %p97, %p98
      %p100 = scmp.ne.s32.totalorder %s91, %s92
      %p101 = scmp.eq.s32.totalorder %s18, 0
      %p102 = por %p100, %p101
      %p103 = scmp.ne.s32.totalorder %s91, %s92
      %p104 = scmp.eq.s32.totalorder %s19, 1
      %p105 = por %p103, %p104
      %p107 = scmp.ne.s32.totalorder %s92, %s106
      %p108 = scmp.eq.s32.totalorder %s19, 0
      %p109 = por %p107, %p108
      %s110 = ssub.s32 %s13, %s20
      %p111 = scmp.eq.s32.totalorder %s110, 0
      %s113 = sadd.s32 %s112, 1
      %s114 = scalar_select %p111, %s112, %s113
      %p117 = pneg %p111
      %p118 = scmp.eq.s32.totalorder %s13, 1
      %p119 = por %p117, %p118
      %p120 = scmp.ne.s32.totalorder %s112, %s115
      %p121 = scmp.eq.s32.totalorder %s13, 0
      %p122 = por %p120, %p121
      %p123 = scmp.ne.s32.totalorder %s112, %s115
      %p124 = scmp.eq.s32.totalorder %s18, 1
      %p125 = por %p123, %p124
      %p126 = scmp.ne.s32.totalorder %s115, %s116
      %p127 = scmp.eq.s32.totalorder %s18, 0
      %p128 = por %p126, %p127
      %p129 = scmp.ne.s32.totalorder %s115, %s116
      %p130 = scmp.eq.s32.totalorder %s19, 1
      %p131 = por %p129, %p130
      %p133 = scmp.ne.s32.totalorder %s116, %s132
      %p134 = scmp.eq.s32.totalorder %s19, 0
      %p135 = por %p133, %p134
      %p136 = scmp.le.s32.totalorder 1, %s13
      %p137 = scmp.lt.s32.totalorder %s13, 3
      %p138 = pnand %p136, %p137
      %p139 = pneg %p138
      // Predicated region
      $region9: #{tpu_custom_call.1} parent=5 // pred_check
        _
      $region10: #{tpu_custom_call.1} parent=5 // pred_check_branch
        %141 = sbr.rel (%p138) target = $region12
      $region11: #{tpu_custom_call.1} parent=5 // pred_region
        %s142 = ssub.s32 %s13, 1
        // Predicated region
        $region13: #{tpu_custom_call.1} parent=11 // pred_check
          %p143 = pneg %p60
        $region14: #{tpu_custom_call.1} parent=11 // pred_check_branch
          %145 = sbr.rel (%p143) target = $region16
        $region15: #{tpu_custom_call.1} parent=11 // pred_region
          _
        $region16: #{tpu_custom_call.1} parent=11 // pred_fallthru
          _
        // Predicated region
        $region17: #{tpu_custom_call.1} parent=11 // pred_check
          %p146 = pneg %p81
        $region18: #{tpu_custom_call.1} parent=11 // pred_check_branch
          %148 = sbr.rel (%p146) target = $region20
        $region19: #{tpu_custom_call.1} parent=11 // pred_region
          _
        $region20: #{tpu_custom_call.1} parent=11 // pred_fallthru
          _
        // Predicated region
        $region21: #{tpu_custom_call.1} parent=11 // pred_check
          %p149 = pneg %p102
        $region22: #{tpu_custom_call.1} parent=11 // pred_check_branch
          %151 = sbr.rel (%p149) target = $region24
        $region23: #{tpu_custom_call.1} parent=11 // pred_region
          _
        $region24: #{tpu_custom_call.1} parent=11 // pred_fallthru
          _
      $region12: #{tpu_custom_call.1} parent=5 // pred_fallthru
        _
      %p152 = scmp.lt.s32.totalorder %s13, 2
      // Predicated region
      $region25: #{tpu_custom_call.1} parent=5 // pred_check
        %p153 = pneg %p152
      $region26: #{tpu_custom_call.1} parent=5 // pred_check_branch
        %155 = sbr.rel (%p153) target = $region28
      $region27: #{tpu_custom_call.1} parent=5 // pred_region
        // Predicated region
        $region29: #{tpu_custom_call.1} parent=27 // pred_check
          %p156 = pneg %p33
        $region30: #{tpu_custom_call.1} parent=27 // pred_check_branch
          %158 = sbr.rel (%p156) target = $region32
        $region31: #{tpu_custom_call.1} parent=27 // pred_region
          %s159 = sand.u32 %s23, 1
          %s160 = sand.u32 %s23, 1
          %s161 = smul.addr %s160, 32
          %s162 = scalar_lea.vmem [#allocation2], %s161
          %s163 = smul.u32 2, %s13
          %s164 = smul.addr %s163, 8
          %s165 = scalar_lea.vmem %s0, %s164
          // Predicated region
          $region33: #{tpu_custom_call.1} parent=31 // pred_check
            _
          $region34: #{tpu_custom_call.1} parent=31 // pred_check_branch
            %167 = sbr.rel (0) target = $region36
          $region35: #{tpu_custom_call.1} parent=31 // pred_region
            // Predicated region
            $region37: #{tpu_custom_call.1} parent=35 // pred_check
              _
            $region38: #{tpu_custom_call.1} parent=35 // pred_check_branch
              %169 = sbr.rel (0) target = $region40
            $region39: #{tpu_custom_call.1} parent=35 // pred_region
              loop: start=0, step=1, limit=1
              $region41: #{tpu_custom_call.1} parent=39 // loop_pre_header
                _
              $region42: #{tpu_custom_call.1} parent=39 // loop_header
                %s171 = sphi 0, %s175
                %p172 = scmp.ge.s32.totalorder %s171, 1
                %s176 = sphi %s165, %s165
                %s177 = sphi %s162, %s162
              $region43: #{tpu_custom_call.1} parent=39 // loop_header_branch
                %174 = sbr.rel (%p172) target = $region47
              $region44: #{tpu_custom_call.1} parent=39 // loop_body
                %v178 = vld [vmem:[%s176] sm:$0xff]
                %179 = vst [vmem:[%s177] sm:$0xff] %v178
                %v180 = vld [vmem:[%s176 + $0x8] sm:$0xff]
                %181 = vst [vmem:[%s177 + $0x8] sm:$0xff] %v180
                %v182 = vld [vmem:[%s176 + $0x20] sm:$0xff]
                %183 = vst [vmem:[%s177 + $0x10] sm:$0xff] %v182
                %v184 = vld [vmem:[%s176 + $0x28] sm:$0xff]
                %185 = vst [vmem:[%s177 + $0x18] sm:$0xff] %v184
              $region45: #{tpu_custom_call.1} parent=39 // loop_footer
                %s175 = sadd.s32 1, %s171
              $region46: #{tpu_custom_call.1} parent=39 // loop_footer_branch
                %170 = sbr.rel target = $region42
              $region47: #{tpu_custom_call.1} parent=39 // loop_exit
                _
            $region40: #{tpu_custom_call.1} parent=35 // pred_fallthru
              _
            // Predicated region
            $region48: #{tpu_custom_call.1} parent=35 // pred_check
              _
            $region49: #{tpu_custom_call.1} parent=35 // pred_check_branch
              %187 = sbr.rel target = $region51
            $region50: #{tpu_custom_call.1} parent=35 // pred_region
              _
            $region51: #{tpu_custom_call.1} parent=35 // pred_fallthru
              _
          $region36: #{tpu_custom_call.1} parent=31 // pred_fallthru
            _
          %188 = vnop
        $region32: #{tpu_custom_call.1} parent=27 // pred_fallthru
          _
      $region28: #{tpu_custom_call.1} parent=5 // pred_fallthru
        _
      %p189 = scmp.le.s32.totalorder 1, %s13
      %p190 = scmp.lt.s32.totalorder %s13, 3
      %p191 = pnand %p189, %p190
      %p192 = pneg %p191
      // Predicated region
      $region52: #{tpu_custom_call.1} parent=5 // pred_check
        _
      $region53: #{tpu_custom_call.1} parent=5 // pred_check_branch
        %194 = sbr.rel (%p191) target = $region55
      $region54: #{tpu_custom_call.1} parent=5 // pred_region
        %s195 = ssub.s32 %s13, 1
        %s196 = sand.u32 %s26, 1
        %s197 = sand.u32 %s26, 1
        %s198 = smul.addr %s197, 32
        %s199 = scalar_lea.vmem [#allocation2], %s198
        // Predicated region
        $region56: #{tpu_custom_call.1} parent=54 // pred_check
          %p200 = pneg %p39
        $region57: #{tpu_custom_call.1} parent=54 // pred_check_branch
          %202 = sbr.rel (%p200) target = $region59
        $region58: #{tpu_custom_call.1} parent=54 // pred_region
          _
        $region59: #{tpu_custom_call.1} parent=54 // pred_fallthru
          _
        %s203 = sand.u32 %s26, 1
        %s204 = sand.u32 %s26, 1
        %s205 = smul.addr %s204, 32
        %s206 = scalar_lea.vmem [#allocation2], %s205
        %p207 = pneg %p39
        %p208 = pneg %p36
        %p209 = pneg %p60
        %p210 = pneg %p57
        %p211 = pneg %p81
        %p212 = pneg %p78
        %p213 = pneg %p102
        %p214 = pneg %p99
        %p215 = pneg %p128
        %p216 = pneg %p125
        %s217 = sand.u32 %s115, 1
        %s218 = scalar_lea.sflag [#allocation4], %s217
        %s219 = sand.u32 %s115, 1
        %s220 = smul.addr %s219, 4
        %s221 = scalar_lea.vmem [#allocation3], %s220
        %s222 = smul.u32 2, %s18
        %s223 = smul.u32 2, %s18
        %v225 = vld [vmem:[%s199] sm:$0xff]
        %v226 = vld [vmem:[%s199 + $0x8] sm:$0xff]
        %v227 = vld [vmem:[%s199 + $0x10] sm:$0x1]
        %v228 = vld [vmem:[%s199 + $0x18] sm:$0x1]
        %v229 = vpack.c.bf16 %v227, %v225
        %v230 = vpack.c.bf16 %v228, %v226
        %v231 = vld [vmem:[%s3] sm:$0xff]
        %v232 = vld [vmem:[%s3 + $0x8] sm:$0xff]
        %v233 = vld [vmem:[%s3 + $0x10] sm:$0xff]
        %v234 = vld [vmem:[%s3 + $0x18] sm:$0xff]
        %v235 = vld [vmem:[%s3 + $0x20] sm:$0xff]
        %v236 = vld [vmem:[%s3 + $0x28] sm:$0xff]
        %v237 = vld [vmem:[%s3 + $0x30] sm:$0xff]
        %v238 = vld [vmem:[%s3 + $0x38] sm:$0xff]
        %v239 = vld [vmem:[%s3 + $0x40] sm:$0xff]
        %v240 = vld [vmem:[%s3 + $0x48] sm:$0xff]
        %v241 = vld [vmem:[%s3 + $0x50] sm:$0xff]
        %v242 = vld [vmem:[%s3 + $0x58] sm:$0xff]
        %v243 = vld [vmem:[%s3 + $0x60] sm:$0xff]
        %v244 = vld [vmem:[%s3 + $0x68] sm:$0xff]
        %v245 = vld [vmem:[%s3 + $0x70] sm:$0xff]
        %v246 = vld [vmem:[%s3 + $0x78] sm:$0xff]
        %v247 = vld [vmem:[%s3 + $0x80] sm:$0xff]
        %v248 = vld [vmem:[%s3 + $0x88] sm:$0xff]
        %v249 = vld [vmem:[%s3 + $0x90] sm:$0xff]
        %v250 = vld [vmem:[%s3 + $0x98] sm:$0xff]
        %v251 = vld [vmem:[%s3 + $0xa0] sm:$0xff]
        %v252 = vld [vmem:[%s3 + $0xa8] sm:$0xff]
        %v253 = vld [vmem:[%s3 + $0xb0] sm:$0xff]
        %v254 = vld [vmem:[%s3 + $0xb8] sm:$0xff]
        %v255 = vld [vmem:[%s1] sm:$0xf]
        %v256 = vld [vmem:[%s1 + $0x4] sm:$0xf]
        %v257 = vld [vmem:[%s1 + $0x8] sm:$0xf]
        %v258 = vld [vmem:[%s1 + $0xc] sm:$0xf]
        %v259 = vld [vmem:[%s1 + $0x10] sm:$0xf]
        %v260 = vld [vmem:[%s1 + $0x14] sm:$0xf]
        %v261 = vld [vmem:[%s1 + $0x18] sm:$0xf]
        %v262 = vld [vmem:[%s1 + $0x1c] sm:$0xf]
        %v263 = vld [vmem:[%s1 + $0x20] sm:$0xf]
        %v264 = vld [vmem:[%s1 + $0x24] sm:$0xf]
        %v265 = vld [vmem:[%s1 + $0x28] sm:$0xf]
        %v266 = vld [vmem:[%s1 + $0x2c] sm:$0xf]
        %268 = vset.pattern.permute.xlu0 0
        %269 = vperm.xlu0 %268, %v231
        %v270 = vpop.permute.xlu0 %269
        %273 = vset.pattern.permute.xlu0 0
        %274 = vperm.xlu0 %273, %v232
        %v275 = vpop.permute.xlu0 %274
        %278 = vset.pattern.permute.xlu0 0
        %279 = vperm.xlu0 %278, %v233
        %v280 = vpop.permute.xlu0 %279
        %283 = vset.pattern.permute.xlu0 0
        %284 = vperm.xlu0 %283, %v234
        %v285 = vpop.permute.xlu0 %284
        %288 = vset.pattern.permute.xlu0 0
        %289 = vperm.xlu0 %288, %v235
        %v290 = vpop.permute.xlu0 %289
        %293 = vset.pattern.permute.xlu0 0
        %294 = vperm.xlu0 %293, %v236
        %v295 = vpop.permute.xlu0 %294
        %298 = vset.pattern.permute.xlu0 0
        %299 = vperm.xlu0 %298, %v237
        %v300 = vpop.permute.xlu0 %299
        %303 = vset.pattern.permute.xlu0 0
        %304 = vperm.xlu0 %303, %v238
        %v305 = vpop.permute.xlu0 %304
        %308 = vset.pattern.permute.xlu0 0
        %309 = vperm.xlu0 %308, %v239
        %v310 = vpop.permute.xlu0 %309
        %313 = vset.pattern.permute.xlu0 0
        %314 = vperm.xlu0 %313, %v240
        %v315 = vpop.permute.xlu0 %314
        %318 = vset.pattern.permute.xlu0 0
        %319 = vperm.xlu0 %318, %v241
        %v320 = vpop.permute.xlu0 %319
        %323 = vset.pattern.permute.xlu0 0
        %324 = vperm.xlu0 %323, %v242
        %v325 = vpop.permute.xlu0 %324
        %v339 = vunpack.c.l.b16 %v255
        %v340 = vunpack.c.l.b16 %v256
        %v341 = vunpack.c.l.b16 %v257
        %v342 = vunpack.c.l.b16 %v258
        %v343 = vunpack.c.l.b16 %v259
        %v344 = vunpack.c.l.b16 %v260
        %v345 = vunpack.c.l.b16 %v261
        %v346 = vunpack.c.l.b16 %v262
        %v347 = vunpack.c.l.b16 %v263
        %v348 = vunpack.c.l.b16 %v264
        %v349 = vunpack.c.l.b16 %v265
        %v350 = vunpack.c.l.b16 %v266
        %v351 = vpack.c.b16 %v340, %v339
        %v352 = vpack.c.b16 %v342, %v341
        %v353 = vpack.c.b16 %v344, %v343
        %v354 = vpack.c.b16 %v346, %v345
        %v355 = vpack.c.b16 %v348, %v347
        %v356 = vpack.c.b16 %v350, %v349
        %vm357 = vcmask 72704
        %v359 = vsel %vm357, %v351, 0
        %v362 = vsel %vm357, %v352, 0
        %v365 = vsel %vm357, %v353, 0
        %v368 = vsel %vm357, %v354, 0
        %v371 = vsel %vm357, %v355, 0
        %v374 = vsel %vm357, %v356, 0
        %vm376 = vcmask 1043456
        %vm377 = vcmask 1044480
        %v378 = vsel %vm376, 4294967295, 65535
        %v379 = vsel %vm377, %v378, 0
        %v381 = vand.u32 %v229, %v379
        %v384 = vand.u32 %v230, %v379
        %386 = vmatprep.subr.bf16.mxu0 0
        %387 = vmatpush1.bf16.msra.mxu0 0
        %388 = vmatprep.subr.bf16.mxu0 0
        %389 = vmatpush1.bf16.msra.mxu0 0
        %390 = vmatprep.subr.bf16.mxu0 0
        %391 = vmatpush1.bf16.msra.mxu0 0
        %392 = vmatprep.subr.bf16.mxu0 0
        %393 = vmatpush1.bf16.msra.mxu0 0
        %394 = vmatprep.subr.bf16.mxu0 0
        %395 = vmatpush1.bf16.msra.mxu0 0
        %396 = vmatprep.subr.bf16.mxu0 0
        %397 = vmatpush1.bf16.msra.mxu0 0
        %398 = vmatprep.subr.bf16.mxu0 0
        %399 = vmatpush1.bf16.msra.mxu0 0
        %400 = vmatprep.subr.bf16.mxu0 %v384
        %401 = vmatpush1.bf16.msra.mxu0 %v381
        %402 = vmatprep.subr.bf16.mxu0 0
        %403 = vmatpush2.bf16.msra.mxu0 0
        %404 = vmatprep.subr.bf16.mxu0 0
        %405 = vmatpush2.bf16.msra.mxu0 0
        %406 = vmatprep.subr.bf16.mxu0 0
        %407 = vmatpush2.bf16.msra.mxu0 0
        %408 = vmatprep.subr.bf16.mxu0 0
        %409 = vmatpush2.bf16.msra.mxu0 0
        %410 = vmatprep.subr.bf16.mxu0 0
        %411 = vmatpush2.bf16.msra.mxu0 0
        %412 = vmatprep.subr.bf16.mxu0 0
        %413 = vmatpush2.bf16.msra.mxu0 0
        %414 = vmatprep.subr.bf16.mxu0 0
        %415 = vmatpush2.bf16.msra.mxu0 0
        %416 = vmatprep.subr.bf16.mxu0 0
        %417 = vmatpush2.bf16.msra.mxu0 0
        %418 = vmatprep.mubr.bf16.mxu0 0
        %419 = vmatmul.mubr.bf16.gmra.mxu0 %v359
        %v420 = vpop.f32.mrf.mxu0
        %v421 = vadd.f32 %v270, %v420
        %v422 = vpop.f32.mrf.mxu0
        %v423 = vadd.f32 %v270, %v422
        %v424 = vpop.f32.mrf.mxu0
        %v425 = vadd.f32 %v275, %v424
        %v426 = vpop.f32.mrf.mxu0
        %v427 = vadd.f32 %v275, %v426
        %428 = vmatprep.mubr.bf16.mxu0 0
        %429 = vmatmul.mubr.bf16.gmra.mxu0 %v362
        %v430 = vpop.f32.mrf.mxu0
        %v431 = vadd.f32 %v280, %v430
        %v432 = vpop.f32.mrf.mxu0
        %v433 = vadd.f32 %v280, %v432
        %v434 = vpop.f32.mrf.mxu0
        %v435 = vadd.f32 %v285, %v434
        %v436 = vpop.f32.mrf.mxu0
        %v437 = vadd.f32 %v285, %v436
        %438 = vmatprep.mubr.bf16.mxu0 0
        %439 = vmatmul.mubr.bf16.gmra.mxu0 %v365
        %v440 = vpop.f32.mrf.mxu0
        %v441 = vadd.f32 %v290, %v440
        %v442 = vpop.f32.mrf.mxu0
        %v443 = vadd.f32 %v290, %v442
        %v444 = vpop.f32.mrf.mxu0
        %v445 = vadd.f32 %v295, %v444
        %v446 = vpop.f32.mrf.mxu0
        %v447 = vadd.f32 %v295, %v446
        %448 = vmatprep.mubr.bf16.mxu0 0
        %449 = vmatmul.mubr.bf16.gmra.mxu0 %v368
        %v450 = vpop.f32.mrf.mxu0
        %v451 = vadd.f32 %v300, %v450
        %v452 = vpop.f32.mrf.mxu0
        %v453 = vadd.f32 %v300, %v452
        %v454 = vpop.f32.mrf.mxu0
        %v455 = vadd.f32 %v305, %v454
        %v456 = vpop.f32.mrf.mxu0
        %v457 = vadd.f32 %v305, %v456
        %458 = vmatprep.mubr.bf16.mxu0 0
        %459 = vmatmul.mubr.bf16.gmra.mxu0 %v371
        %v460 = vpop.f32.mrf.mxu0
        %v461 = vadd.f32 %v310, %v460
        %v462 = vpop.f32.mrf.mxu0
        %v463 = vadd.f32 %v310, %v462
        %v464 = vpop.f32.mrf.mxu0
        %v465 = vadd.f32 %v315, %v464
        %v466 = vpop.f32.mrf.mxu0
        %v467 = vadd.f32 %v315, %v466
        %468 = vmatprep.mubr.bf16.mxu0 0
        %469 = vmatmul.mubr.bf16.gmra.mxu0 %v374
        %v470 = vpop.f32.mrf.mxu0
        %v471 = vadd.f32 %v320, %v470
        %v472 = vpop.f32.mrf.mxu0
        %v473 = vadd.f32 %v320, %v472
        %v474 = vpop.f32.mrf.mxu0
        %v475 = vadd.f32 %v325, %v474
        %v476 = vpop.f32.mrf.mxu0
        %v477 = vadd.f32 %v325, %v476
        %478 = vdwg.mxu0
        %v479 = vmul.f32 %v421, 0.01
        %v480 = vmul.f32 %v423, 0.01
        %v481 = vmul.f32 %v425, 0.01
        %v482 = vmul.f32 %v427, 0.01
        %v483 = vmul.f32 %v431, 0.01
        %v484 = vmul.f32 %v433, 0.01
        %v485 = vmul.f32 %v435, 0.01
        %v486 = vmul.f32 %v437, 0.01
        %v487 = vmul.f32 %v441, 0.01
        %v488 = vmul.f32 %v443, 0.01
        %v489 = vmul.f32 %v445, 0.01
        %v490 = vmul.f32 %v447, 0.01
        %v491 = vmul.f32 %v451, 0.01
        %v492 = vmul.f32 %v453, 0.01
        %v493 = vmul.f32 %v455, 0.01
        %v494 = vmul.f32 %v457, 0.01
        %v495 = vmul.f32 %v461, 0.01
        %v496 = vmul.f32 %v463, 0.01
        %v497 = vmul.f32 %v465, 0.01
        %v498 = vmul.f32 %v467, 0.01
        %v499 = vmul.f32 %v471, 0.01
        %v500 = vmul.f32 %v473, 0.01
        %v501 = vmul.f32 %v475, 0.01
        %v502 = vmul.f32 %v477, 0.01
        %v503 = vmax.f32 %v421, %v479
        %v504 = vmax.f32 %v423, %v480
        %v505 = vmax.f32 %v425, %v481
        %v506 = vmax.f32 %v427, %v482
        %v507 = vmax.f32 %v431, %v483
        %v508 = vmax.f32 %v433, %v484
        %v509 = vmax.f32 %v435, %v485
        %v510 = vmax.f32 %v437, %v486
        %v511 = vmax.f32 %v441, %v487
        %v512 = vmax.f32 %v443, %v488
        %v513 = vmax.f32 %v445, %v489
        %v514 = vmax.f32 %v447, %v490
        %v515 = vmax.f32 %v451, %v491
        %v516 = vmax.f32 %v453, %v492
        %v517 = vmax.f32 %v455, %v493
        %v518 = vmax.f32 %v457, %v494
        %v519 = vmax.f32 %v461, %v495
        %v520 = vmax.f32 %v463, %v496
        %v521 = vmax.f32 %v465, %v497
        %v522 = vmax.f32 %v467, %v498
        %v523 = vmax.f32 %v471, %v499
        %v524 = vmax.f32 %v473, %v500
        %v525 = vmax.f32 %v475, %v501
        %v526 = vmax.f32 %v477, %v502
        %v527 = vld [vmem:[%s2] sm:$0xf]
        %v528 = vld [vmem:[%s2 + $0x4] sm:$0xf]
        %v529 = vld [vmem:[%s2 + $0x8] sm:$0xf]
        %v530 = vld [vmem:[%s2 + $0xc] sm:$0xf]
        %v531 = vld [vmem:[%s2 + $0x10] sm:$0xf]
        %v532 = vld [vmem:[%s2 + $0x14] sm:$0xf]
        %v533 = vpack.c.bf16 %v505, %v503
        %v534 = vpack.c.bf16 %v506, %v504
        %v535 = vpack.c.bf16 %v509, %v507
        %v536 = vpack.c.bf16 %v510, %v508
        %v537 = vpack.c.bf16 %v513, %v511
        %v538 = vpack.c.bf16 %v514, %v512
        %v539 = vpack.c.bf16 %v517, %v515
        %v540 = vpack.c.bf16 %v518, %v516
        %v541 = vpack.c.bf16 %v521, %v519
        %v542 = vpack.c.bf16 %v522, %v520
        %v543 = vpack.c.bf16 %v525, %v523
        %v544 = vpack.c.bf16 %v526, %v524
        %546 = vset.pattern.permute.xlu0 0
        %547 = vperm.xlu0 %546, %v243
        %v548 = vpop.permute.xlu0 %547
        %551 = vset.pattern.permute.xlu0 0
        %552 = vperm.xlu0 %551, %v244
        %v553 = vpop.permute.xlu0 %552
        %556 = vset.pattern.permute.xlu0 0
        %557 = vperm.xlu0 %556, %v245
        %v558 = vpop.permute.xlu0 %557
        %561 = vset.pattern.permute.xlu0 0
        %562 = vperm.xlu0 %561, %v246
        %v563 = vpop.permute.xlu0 %562
        %566 = vset.pattern.permute.xlu0 0
        %567 = vperm.xlu0 %566, %v247
        %v568 = vpop.permute.xlu0 %567
        %571 = vset.pattern.permute.xlu0 0
        %572 = vperm.xlu0 %571, %v248
        %v573 = vpop.permute.xlu0 %572
        %v581 = vunpack.c.l.b16 %v527
        %v582 = vunpack.c.l.b16 %v528
        %v583 = vunpack.c.l.b16 %v529
        %v584 = vunpack.c.l.b16 %v530
        %v585 = vunpack.c.l.b16 %v531
        %v586 = vunpack.c.l.b16 %v532
        %v587 = vpack.c.b16 %v582, %v581
        %v588 = vpack.c.b16 %v584, %v583
        %v589 = vpack.c.b16 %v586, %v585
        %vm590 = vcmask 785408
        %v592 = vsel %vm590, %v587, 0
        %v595 = vsel %vm590, %v588, 0
        %v598 = vsel %vm590, %v589, 0
        %600 = vmatprep.subr.bf16.mxu0 0
        %601 = vmatpush1.bf16.msra.mxu0 0
        %602 = vmatprep.subr.bf16.mxu0 0
        %603 = vmatpush1.bf16.msra.mxu0 0
        %604 = vmatprep.subr.bf16.mxu0 %v544
        %605 = vmatpush1.bf16.msra.mxu0 %v543
        %606 = vmatprep.subr.bf16.mxu0 %v542
        %607 = vmatpush1.bf16.msra.mxu0 %v541
        %608 = vmatprep.subr.bf16.mxu0 %v540
        %609 = vmatpush1.bf16.msra.mxu0 %v539
        %610 = vmatprep.subr.bf16.mxu0 %v538
        %611 = vmatpush1.bf16.msra.mxu0 %v537
        %612 = vmatprep.subr.bf16.mxu0 %v536
        %613 = vmatpush1.bf16.msra.mxu0 %v535
        %614 = vmatprep.subr.bf16.mxu0 %v534
        %615 = vmatpush1.bf16.msra.mxu0 %v533
        %616 = vmatprep.subr.bf16.mxu0 0
        %617 = vmatpush2.bf16.msra.mxu0 0
        %618 = vmatprep.subr.bf16.mxu0 0
        %619 = vmatpush2.bf16.msra.mxu0 0
        %620 = vmatprep.subr.bf16.mxu0 0
        %621 = vmatpush2.bf16.msra.mxu0 0
        %622 = vmatprep.subr.bf16.mxu0 0
        %623 = vmatpush2.bf16.msra.mxu0 0
        %624 = vmatprep.subr.bf16.mxu0 0
        %625 = vmatpush2.bf16.msra.mxu0 0
        %626 = vmatprep.subr.bf16.mxu0 0
        %627 = vmatpush2.bf16.msra.mxu0 0
        %628 = vmatprep.subr.bf16.mxu0 0
        %629 = vmatpush2.bf16.msra.mxu0 0
        %630 = vmatprep.subr.bf16.mxu0 0
        %631 = vmatpush2.bf16.msra.mxu0 0
        %632 = vmatprep.mubr.bf16.mxu0 0
        %633 = vmatmul.mubr.bf16.gmra.mxu0 %v592
        %v634 = vpop.f32.mrf.mxu0
        %v635 = vadd.f32 %v548, %v634
        %v636 = vpop.f32.mrf.mxu0
        %v637 = vadd.f32 %v548, %v636
        %v638 = vpop.f32.mrf.mxu0
        %v639 = vadd.f32 %v553, %v638
        %v640 = vpop.f32.mrf.mxu0
        %v641 = vadd.f32 %v553, %v640
        %642 = vmatprep.mubr.bf16.mxu0 0
        %643 = vmatmul.mubr.bf16.gmra.mxu0 %v595
        %v644 = vpop.f32.mrf.mxu0
        %v645 = vadd.f32 %v558, %v644
        %v646 = vpop.f32.mrf.mxu0
        %v647 = vadd.f32 %v558, %v646
        %v648 = vpop.f32.mrf.mxu0
        %v649 = vadd.f32 %v563, %v648
        %v650 = vpop.f32.mrf.mxu0
        %v651 = vadd.f32 %v563, %v650
        %652 = vmatprep.mubr.bf16.mxu0 0
        %653 = vmatmul.mubr.bf16.gmra.mxu0 %v598
        %v654 = vpop.f32.mrf.mxu0
        %v655 = vadd.f32 %v568, %v654
        %v656 = vpop.f32.mrf.mxu0
        %v657 = vadd.f32 %v568, %v656
        %v658 = vpop.f32.mrf.mxu0
        %v659 = vadd.f32 %v573, %v658
        %v660 = vpop.f32.mrf.mxu0
        %v661 = vadd.f32 %v573, %v660
        %662 = vdwg.mxu0
        %v663 = vmul.f32 %v635, 0.01
        %v664 = vmul.f32 %v637, 0.01
        %v665 = vmul.f32 %v639, 0.01
        %v666 = vmul.f32 %v641, 0.01
        %v667 = vmul.f32 %v645, 0.01
        %v668 = vmul.f32 %v647, 0.01
        %v669 = vmul.f32 %v649, 0.01
        %v670 = vmul.f32 %v651, 0.01
        %v671 = vmul.f32 %v655, 0.01
        %v672 = vmul.f32 %v657, 0.01
        %v673 = vmul.f32 %v659, 0.01
        %v674 = vmul.f32 %v661, 0.01
        %v675 = vmax.f32 %v635, %v663
        %v676 = vmax.f32 %v637, %v664
        %v677 = vmax.f32 %v639, %v665
        %v678 = vmax.f32 %v641, %v666
        %v679 = vmax.f32 %v645, %v667
        %v680 = vmax.f32 %v647, %v668
        %v681 = vmax.f32 %v649, %v669
        %v682 = vmax.f32 %v651, %v670
        %v683 = vmax.f32 %v655, %v671
        %v684 = vmax.f32 %v657, %v672
        %v685 = vmax.f32 %v659, %v673
        %v686 = vmax.f32 %v661, %v674
        %688 = vset.pattern.permute.xlu0 0
        %689 = vperm.xlu0 %688, %v249
        %v690 = vpop.permute.xlu0 %689
        %693 = vset.pattern.permute.xlu0 0
        %694 = vperm.xlu0 %693, %v250
        %v695 = vpop.permute.xlu0 %694
        %698 = vset.pattern.permute.xlu0 0
        %699 = vperm.xlu0 %698, %v251
        %v700 = vpop.permute.xlu0 %699
        %703 = vset.pattern.permute.xlu0 0
        %704 = vperm.xlu0 %703, %v252
        %v705 = vpop.permute.xlu0 %704
        %708 = vset.pattern.permute.xlu0 0
        %709 = vperm.xlu0 %708, %v253
        %v710 = vpop.permute.xlu0 %709
        %713 = vset.pattern.permute.xlu0 0
        %714 = vperm.xlu0 %713, %v254
        %v715 = vpop.permute.xlu0 %714
        %v717 = vadd.f32 %v675, %v690
        %v718 = vadd.f32 %v676, %v690
        %v719 = vadd.f32 %v677, %v695
        %v720 = vadd.f32 %v678, %v695
        %v721 = vadd.f32 %v679, %v700
        %v722 = vadd.f32 %v680, %v700
        %v723 = vadd.f32 %v681, %v705
        %v724 = vadd.f32 %v682, %v705
        %v725 = vadd.f32 %v683, %v710
        %v726 = vadd.f32 %v684, %v710
        %v727 = vadd.f32 %v685, %v715
        %v728 = vadd.f32 %v686, %v715
        %v729 = vmax.f32 %v721, -13.815511
        %v730 = vmax.f32 %v722, -13.815511
        %v731 = vmax.f32 %v723, -13.815511
        %v732 = vmax.f32 %v724, -13.815511
        %v733 = vsub.f32 0.0, %v729
        %v734 = vsub.f32 0.0, %v730
        %v735 = vsub.f32 0.0, %v731
        %v736 = vsub.f32 0.0, %v732
        %v737 = vmul.f32 %v733, 1.442695
        %v738 = vpow.pop %v737
        %v739 = vmul.f32 %v734, 1.442695
        %v740 = vpow.pop %v739
        %v741 = vmul.f32 %v735, 1.442695
        %v742 = vpow.pop %v741
        %v743 = vmul.f32 %v736, 1.442695
        %v744 = vpow.pop %v743
        %v745 = vlaneseq
        %v746 = vshrl.u32 %v745, 7
        %v747 = vsub.s32 0, %v746
        %v748 = vrot.slane %v227, %v747
        %v749 = vlaneseq
        %v750 = vshrl.u32 %v749, 7
        %v751 = vsub.s32 0, %v750
        %v752 = vrot.slane %v228, %v751
        %v753 = vsub.f32 %v748, %v717
        %v754 = vsub.f32 %v752, %v718
        %v755 = vsub.f32 %v748, %v719
        %v756 = vsub.f32 %v752, %v720
        %v757 = vmul.f32 %v753, %v738
        %v758 = vmul.f32 %v754, %v740
        %v759 = vmul.f32 %v755, %v742
        %v760 = vmul.f32 %v756, %v744
        %v761 = vmul.f32 %v757, -0.5
        %v762 = vmul.f32 %v758, -0.5
        %v763 = vmul.f32 %v759, -0.5
        %v764 = vmul.f32 %v760, -0.5
        %v765 = vmul.f32 %v761, %v757
        %v766 = vmul.f32 %v762, %v758
        %v767 = vmul.f32 %v763, %v759
        %v768 = vmul.f32 %v764, %v760
        %v769 = vmul.f32 %v765, 1.442695
        %v770 = vpow.pop %v769
        %v771 = vmul.f32 %v766, 1.442695
        %v772 = vpow.pop %v771
        %v773 = vmul.f32 %v767, 1.442695
        %v774 = vpow.pop %v773
        %v775 = vmul.f32 %v768, 1.442695
        %v776 = vpow.pop %v775
        %v777 = vand.u32 2147483647, %v757
        %v778 = vand.u32 2147483647, %v758
        %v779 = vand.u32 2147483647, %v759
        %v780 = vand.u32 2147483647, %v760
        %v781 = vmul.f32 %v777, 0.70710677
        %v782 = vmul.f32 %v778, 0.70710677
        %v783 = vmul.f32 %v779, 0.70710677
        %v784 = vmul.f32 %v780, 0.70710677
        %v785 = vmul.f32 %v781, 0.47047
        %v786 = vmul.f32 %v782, 0.47047
        %v787 = vmul.f32 %v783, 0.47047
        %v788 = vmul.f32 %v784, 0.47047
        %v789 = vadd.f32 %v785, 1.0
        %v790 = vadd.f32 %v786, 1.0
        %v791 = vadd.f32 %v787, 1.0
        %v792 = vadd.f32 %v788, 1.0
        %v793 = vrcp.pop %v789
        %v794 = vrcp.pop %v790
        %v795 = vrcp.pop %v791
        %v796 = vrcp.pop %v792
        %v797 = vmul.f32 %v793, 0.7478556
        %v798 = vmul.f32 %v794, 0.7478556
        %v799 = vmul.f32 %v795, 0.7478556
        %v800 = vmul.f32 %v796, 0.7478556
        %v801 = vadd.f32 %v797, -0.0958798
        %v802 = vadd.f32 %v798, -0.0958798
        %v803 = vadd.f32 %v799, -0.0958798
        %v804 = vadd.f32 %v800, -0.0958798
        %v805 = vmul.f32 %v801, %v793
        %v806 = vmul.f32 %v802, %v794
        %v807 = vmul.f32 %v803, %v795
        %v808 = vmul.f32 %v804, %v796
        %v809 = vadd.f32 %v805, 0.3480242
        %v810 = vadd.f32 %v806, 0.3480242
        %v811 = vadd.f32 %v807, 0.3480242
        %v812 = vadd.f32 %v808, 0.3480242
        %v813 = vmul.f32 %v809, %v793
        %v814 = vmul.f32 %v810, %v794
        %v815 = vmul.f32 %v811, %v795
        %v816 = vmul.f32 %v812, %v796
        %v817 = vmul.f32 %v813, 0.5
        %v818 = vmul.f32 %v814, 0.5
        %v819 = vmul.f32 %v815, 0.5
        %v820 = vmul.f32 %v816, 0.5
        %v821 = vmul.f32 %v817, %v770
        %v822 = vmul.f32 %v818, %v772
        %v823 = vmul.f32 %v819, %v774
        %v824 = vmul.f32 %v820, %v776
        %vm825 = vcmp.ge.f32.partialorder %v757, 0.0
        %vm826 = vcmp.ge.f32.partialorder %v758, 0.0
        %vm827 = vcmp.ge.f32.partialorder %v759, 0.0
        %vm828 = vcmp.ge.f32.partialorder %v760, 0.0
        %v829 = vsub.f32 1.0, %v821
        %v830 = vsub.f32 1.0, %v822
        %v831 = vsub.f32 1.0, %v823
        %v832 = vsub.f32 1.0, %v824
        %v833 = vsel %vm825, %v829, %v821
        %v834 = vsel %vm826, %v830, %v822
        %v835 = vsel %vm827, %v831, %v823
        %v836 = vsel %vm828, %v832, %v824
        %v837 = vmul.f32 %v770, %v738
        %v838 = vmul.f32 %v772, %v740
        %v839 = vmul.f32 %v774, %v742
        %v840 = vmul.f32 %v776, %v744
        %v841 = vmul.f32 %v837, 0.3989423
        %v842 = vmul.f32 %v838, 0.3989423
        %v843 = vmul.f32 %v839, 0.3989423
        %v844 = vmul.f32 %v840, 0.3989423
        %v845 = vmax.f32 %v725, %v727
        %v846 = vrot.slane %v845, 4
        %v847 = vmax.f32 %v845, %v846
        %v848 = vrot.slane %v847, 2
        %v849 = vmax.f32 %v847, %v848
        %v850 = vrot.slane %v849, 1
        %v851 = vmax.f32 %v849, %v850
        %v852 = vmax.f32 %v726, %v728
        %v853 = vrot.slane %v852, 4
        %v854 = vmax.f32 %v852, %v853
        %v855 = vrot.slane %v854, 2
        %v856 = vmax.f32 %v854, %v855
        %v857 = vrot.slane %v856, 1
        %v858 = vmax.f32 %v856, %v857
        %v859 = vsub.f32 %v725, %v851
        %v860 = vsub.f32 %v726, %v858
        %v861 = vsub.f32 %v727, %v851
        %v862 = vsub.f32 %v728, %v858
        %v863 = vmul.f32 %v859, 1.442695
        %v864 = vpow.pop %v863
        %v865 = vmul.f32 %v860, 1.442695
        %v866 = vpow.pop %v865
        %v867 = vmul.f32 %v861, 1.442695
        %v868 = vpow.pop %v867
        %v869 = vmul.f32 %v862, 1.442695
        %v870 = vpow.pop %v869
        %v871 = vadd.f32 %v864, %v868
        %v872 = vrot.slane %v871, 4
        %v873 = vadd.f32 %v871, %v872
        %v874 = vrot.slane %v873, 2
        %v875 = vadd.f32 %v873, %v874
        %v876 = vrot.slane %v875, 1
        %v877 = vadd.f32 %v875, %v876
        %v878 = vadd.f32 %v866, %v870
        %v879 = vrot.slane %v878, 4
        %v880 = vadd.f32 %v878, %v879
        %v881 = vrot.slane %v880, 2
        %v882 = vadd.f32 %v880, %v881
        %v883 = vrot.slane %v882, 1
        %v884 = vadd.f32 %v882, %v883
        %v885 = vrcp.pop %v877
        %v886 = vrcp.pop %v884
        %v887 = vmul.f32 %v864, %v885
        %v888 = vmul.f32 %v866, %v886
        %v889 = vmul.f32 %v868, %v885
        %v890 = vmul.f32 %v870, %v886
        %v891 = vmul.f32 %v833, %v887
        %v892 = vmul.f32 %v834, %v888
        %v893 = vmul.f32 %v835, %v889
        %v894 = vmul.f32 %v836, %v890
        %v895 = vadd.f32 %v891, %v893
        %v896 = vrot.slane %v895, 4
        %v897 = vadd.f32 %v895, %v896
        %v898 = vrot.slane %v897, 2
        %v899 = vadd.f32 %v897, %v898
        %v900 = vrot.slane %v899, 1
        %v901 = vadd.f32 %v899, %v900
        %v902 = vadd.f32 %v892, %v894
        %v903 = vrot.slane %v902, 4
        %v904 = vadd.f32 %v902, %v903
        %v905 = vrot.slane %v904, 2
        %v906 = vadd.f32 %v904, %v905
        %v907 = vrot.slane %v906, 1
        %v908 = vadd.f32 %v906, %v907
        %v909 = vmul.f32 %v841, %v887
        %v910 = vmul.f32 %v842, %v888
        %v911 = vmul.f32 %v843, %v889
        %v912 = vmul.f32 %v844, %v890
        %v913 = vadd.f32 %v909, %v911
        %v914 = vrot.slane %v913, 4
        %v915 = vadd.f32 %v913, %v914
        %v916 = vrot.slane %v915, 2
        %v917 = vadd.f32 %v915, %v916
        %v918 = vrot.slane %v917, 1
        %v919 = vadd.f32 %v917, %v918
        %v920 = vadd.f32 %v910, %v912
        %v921 = vrot.slane %v920, 4
        %v922 = vadd.f32 %v920, %v921
        %v923 = vrot.slane %v922, 2
        %v924 = vadd.f32 %v922, %v923
        %v925 = vrot.slane %v924, 1
        %v926 = vadd.f32 %v924, %v925
        %v927 = vmax.f32 %v919, 1e-24
        %v928 = vmax.f32 %v926, 1e-24
        %v931 = vcombine.low %v901, %v908
        %v933 = vunpack.c.l.s4 1966171168
        %v934 = vunpack.c.0.s8 %v933
        %v935 = vlaneseq
        %v936 = vshrl.u32 %v935, 7
        %v937 = vsub.s32 %v934, %v936
        %v938 = vrot.slane %v931, %v937
        %v940 = vunpack.c.l.s4 1966171168
        %v941 = vunpack.c.0.s8 %v940
        %v942 = vlaneseq
        %v943 = vshrl.u32 %v942, 7
        %v944 = vsub.s32 %v941, %v943
        %v945 = vrot.slane %v938, %v944
        %v947 = vlaneseq
        %vm948 = vcmp.ge.s32.totalorder %v947, 0
        %vm949 = vcmp.lt.s32.totalorder %v947, 256
        %vm950 = vmand %vm948, %vm949
        %951 = vst.msk [vmem:[%s221] ss:$2 sm:$0x3] %vm950, %v945
        %v952 = vlog2.pop %v927
        %v953 = vmul.f32 %v952, 0.6931472
        %v954 = vlog2.pop %v928
        %v955 = vmul.f32 %v954, 0.6931472
        %v958 = vcombine.low %v953, %v955
        %v960 = vunpack.c.l.s4 1966171168
        %v961 = vunpack.c.0.s8 %v960
        %v962 = vlaneseq
        %v963 = vshrl.u32 %v962, 7
        %v964 = vsub.s32 %v961, %v963
        %v965 = vrot.slane %v958, %v964
        %v967 = vunpack.c.l.s4 1966171168
        %v968 = vunpack.c.0.s8 %v967
        %v969 = vlaneseq
        %v970 = vshrl.u32 %v969, 7
        %v971 = vsub.s32 %v968, %v970
        %v972 = vrot.slane %v965, %v971
        %s974 = scalar_lea.vmem %s221, 1 [#allocation3]
        %975 = vst.msk [vmem:[%s974] ss:$2 sm:$0x3] %vm950, %v972
        %s976 = sand.u32 %s115, 1
        %s977 = scalar_lea.sflag [#allocation4], %s976
        %s978 = sand.u32 %s115, 1
        %s979 = smul.addr %s978, 4
        %s980 = scalar_lea.vmem [#allocation3], %s979
        // Predicated region
        $region60: #{tpu_custom_call.1} parent=54 // pred_check
          %p981 = pneg %p125
        $region61: #{tpu_custom_call.1} parent=54 // pred_check_branch
          %983 = sbr.rel (%p981) target = $region63
        $region62: #{tpu_custom_call.1} parent=54 // pred_region
          %s984 = smul.u32 2, %s18
          %s986 = ssub.s32 64, 64
          %987 = vsyncadd %s977, %s986
          %s988 = smul.addr %s984, 32
          %s989 = scalar_lea.hbm %s4, %s988
          %s991 = sshll.u32 %s980, 4
          %s992 = int_to_ptr.vmem [resolvable:$true] %s991
          %994 = dma.vmem_to_hbm [thread:$0]  %s992, 64, %s989, %s977
        $region63: #{tpu_custom_call.1} parent=54 // pred_fallthru
          _
      $region55: #{tpu_custom_call.1} parent=5 // pred_fallthru
        _
      %p995 = scmp.le.s32.totalorder 2, %s13
      // Predicated region
      $region64: #{tpu_custom_call.1} parent=5 // pred_check
        %p996 = pneg %p995
      $region65: #{tpu_custom_call.1} parent=5 // pred_check_branch
        %998 = sbr.rel (%p996) target = $region67
      $region66: #{tpu_custom_call.1} parent=5 // pred_region
        %s999 = ssub.s32 %s13, 2
        // Predicated region
        $region68: #{tpu_custom_call.1} parent=66 // pred_check
          %p1000 = pneg %p131
        $region69: #{tpu_custom_call.1} parent=66 // pred_check_branch
          %1002 = sbr.rel (%p1000) target = $region71
        $region70: #{tpu_custom_call.1} parent=66 // pred_region
          %s1003 = sand.u32 %s116, 1
          %s1004 = scalar_lea.sflag [#allocation4], %s1003
          %s1005 = sand.u32 %s116, 1
          %s1006 = smul.addr %s1005, 4
          %s1007 = scalar_lea.vmem [#allocation3], %s1006
          %1008 = dma.done %s1004, 64
        $region71: #{tpu_custom_call.1} parent=66 // pred_fallthru
          _
      $region67: #{tpu_custom_call.1} parent=5 // pred_fallthru
        _
    $region6: #{tpu_custom_call.1} parent=1 // loop_footer
      %s17 = sadd.s32 1, %s13
    $region7: #{tpu_custom_call.1} parent=1 // loop_footer_branch
      %12 = sbr.rel target = $region3
    $region8: #{tpu_custom_call.1} parent=1 // loop_exit
      _
    %1009 = vsyncpa [#allocation4], 1
    %s1010 = scalar_lea.sflag [#allocation4], 1
    %1011 = vsyncpa %s1010, 1

</llo_original>
